<compile_context>
chip_gen: v6e
topology: v6e:2x2x1
jax: 0.10.0
libtpu: 0.0.40
codegen_flags: <defaults>
</compile_context>

<pallas_src>
import functools

import jax
import jax.numpy as jnp
from jax import lax
from jax.experimental import pallas as pl
from jax.experimental.pallas import tpu as pltpu


@functools.lru_cache(maxsize=None)
def _vmem_limit_bytes():
    """Scoped-VMEM budget derived from the chip (128 MiB v5e/v6e, 64 MiB v7x)."""
    try:
        cap = int(pltpu.get_tpu_info().vmem_capacity_bytes)
        if cap <= 0:
            raise ValueError("bad vmem capacity")
    except Exception:
        return 48 * 1024 * 1024          # conservative fallback, safe on every generation
    return min(int(cap * 0.8), 110 * 1024 * 1024)


def _pick_t_tile(T, H, W, cin, cout):
    """Largest temporal tile whose per-block VMEM footprint fits the budget."""
    budget = int(0.6 * _vmem_limit_bytes())
    c = max(cin, cout)

    def est(tt):
        act = tt * H * W
        return (3 * 2 * act * c * 4                    # x / residual / output blocks (x2 buf)
                + 2 * 2 * H * W * c * 4                # temporal halo block
                + 2 * 27 * cin * cout * 2              # folded bf16 weights
                + (tt + 2) * (H + 2) * (W + 2) * c * 4   # padded f32 scratch
                + (tt + 2) * (H + 2) * W * 3 * c * 2     # kw-folded bf16 value
                + act * cout * 4)                        # f32 accumulator

    cands = [d for d in range(1, T + 1) if T % d == 0 and (d == T or d % 2 == 0)]
    fits = [d for d in cands if est(d) <= budget]
    return max(fits) if fits else min(cands)


# ---------------------------------------------------------------------------
# Kernel 1: per-(batch, channel) sum / sum-of-squares of the input (norm1 stats).
# The (tiny) group-reduce + rsqrt + gamma/beta finalize is done in plain jnp on
# (B, C)-sized arrays in the wrapper.
# ---------------------------------------------------------------------------
def _channel_moments_kernel(x_ref, sum_ref, ssq_ref):
    t_idx = pl.program_id(1)
    c = x_ref.shape[-1]
    x = x_ref[0].astype(jnp.float32).reshape(-1, c)           # (Tt*H*W, C)
    s = jnp.sum(x, axis=0, keepdims=True)                     # (1, C)
    q = jnp.sum(x * x, axis=0, keepdims=True)

    @pl.when(t_idx == 0)
    def _init():
        sum_ref[0] = s
        ssq_ref[0] = q

    @pl.when(t_idx > 0)
    def _accumulate():
        sum_ref[0] = sum_ref[0] + s
        ssq_ref[0] = ssq_ref[0] + q


def channel_moments(x, t_tile):
    B, T, H, W, C = x.shape
    assert T % t_tile == 0
    n_t = T // t_tile
    return pl.pallas_call(
        _channel_moments_kernel,
        out_shape=(jax.ShapeDtypeStruct((B, 1, C), jnp.float32),
                   jax.ShapeDtypeStruct((B, 1, C), jnp.float32)),
        grid=(B, n_t),
        in_specs=[pl.BlockSpec((1, t_tile, H, W, C), lambda b, t: (b, t, 0, 0, 0))],
        out_specs=(pl.BlockSpec((1, 1, C), lambda b, t: (b, 0, 0)),
                   pl.BlockSpec((1, 1, C), lambda b, t: (b, 0, 0))),
        compiler_params=pltpu.CompilerParams(
            dimension_semantics=("parallel", "arbitrary"),
            vmem_limit_bytes=_vmem_limit_bytes()),
    )(x)


def _gn_scale_shift_from_moments(s, q, gamma, beta, num_groups, eps, count):
    """(B,1,C) sum / sumsq -> per-(b, channel) GroupNorm scale/shift ((B,1,C) f32)."""
    # TODO(synk): E[x^2]-E[x]^2 can cancel at very large reductions; Welford merge if needed.
    B, _, C = s.shape
    G = num_groups
    sg = s.reshape(B, G, C // G).sum(axis=-1)                  # (B, G)
    qg = q.reshape(B, G, C // G).sum(axis=-1)
    mean = sg / count
    var = jnp.maximum(qg / count - mean * mean, 0.0)
    rstd = lax.rsqrt(var + eps)
    mean_c = jnp.repeat(mean, C // G, axis=-1)                 # (B, C)
    rstd_c = jnp.repeat(rstd, C // G, axis=-1)
    scale = gamma[None, :] * rstd_c
    shift = beta[None, :] - mean_c * scale
    return scale.reshape(B, 1, C).astype(jnp.float32), shift.reshape(B, 1, C).astype(jnp.float32)


# ---------------------------------------------------------------------------
# Kernel 2: fused  normalize (scale/shift) + SiLU + causal 3x3x3 conv
#           [+ norm2 sum/sumsq emission]  [+ residual shortcut + 1/output_scale_factor]
#
# The causal temporal pad (2) + spatial pad (1) is assembled in a VMEM scratch; the
# temporal halo of each tile arrives via an overlapping BlockSpec on the same input.
# Only the borders are re-zeroed per step; the kw taps are folded once per step
# (K = 3*Cin) and the matmul inputs are bf16 with f32 accumulation.
# ---------------------------------------------------------------------------
def _fused_norm_silu_conv3d_kernel(*refs, emit_stats, fuse_residual, has_projection,
                                   inv_out_scale):
    (x_ref, halo_ref, scale_ref, shift_ref, w_ref, b_ref), rest = refs[:6], refs[6:]
    if fuse_residual:
        r_ref, rest = rest[0], rest[1:]
        if has_projection:
            scw_ref, scb_ref, rest = rest[0], rest[1], rest[2:]
        else:
            scw_ref = scb_ref = None
    else:
        r_ref = scw_ref = scb_ref = None
    o_ref, rest = rest[0], rest[1:]
    if emit_stats:
        sum_ref, ssq_ref, rest = rest[0], rest[1], rest[2:]
    else:
        sum_ref = ssq_ref = None
    (pad_ref,) = rest

    t_idx = pl.program_id(1)
    _, tt, h, w, cin = x_ref.shape
    cout = o_ref.shape[-1]
    halo_t = halo_ref.shape[1]
    rows = tt * h * w

    scale = scale_ref[0]           # (1, Cin) GroupNorm scale  (gamma * rstd)
    shift = shift_ref[0]           # (1, Cin) GroupNorm shift  (beta - mean * scale)

    # --- zero only the borders (not the whole scratch) --------------------------------
    zrow = jnp.zeros((tt + 2, 1, w + 2, cin), jnp.float32)
    pad_ref[:, 0:1, :, :] = zrow
    pad_ref[:, h + 1:h + 2, :, :] = zrow
    zcol = jnp.zeros((tt + 2, h + 2, 1, cin), jnp.float32)
    pad_ref[:, :, 0:1, :] = zcol
    pad_ref[:, :, w + 1:w + 2, :] = zcol

    @pl.when(t_idx == 0)
    def _zero_causal_lead():                       # sequence start: causal pad is zeros
        pad_ref[0:2, 1:1 + h, 1:1 + w, :] = jnp.zeros((2, h, w, cin), jnp.float32)

    # --- normalize + SiLU (f32 VPU math), write into the padded scratch ---------------
    xm = x_ref[0].astype(jnp.float32)
    am = xm * scale + shift
    am = am * jax.nn.sigmoid(am)
    pad_ref[2:2 + tt, 1:1 + h, 1:1 + w, :] = am

    @pl.when(t_idx > 0)
    def _halo():                                   # real previous frames (not padding)
        xh = halo_ref[0].astype(jnp.float32)
        ah = xh * scale + shift
        ah = ah * jax.nn.sigmoid(ah)
        pad_ref[2 - halo_t:2, 1:1 + h, 1:1 + w, :] = ah

    # --- conv: fold kw once for the whole padded volume, 9 bf16 matmuls (K = 3*Cin) ---
    buf = pad_ref[...]                                              # (tt+2, h+2, w+2, cin)
    # TODO(synk): the +1/+2 column offsets are sublane shifts; at production shapes use
    # pltpu.roll on the W axis (XLU) or an 8-aligned W padding instead.
    awbuf = jnp.concatenate(
        [buf[:, :, 0:w, :], buf[:, :, 1:1 + w, :], buf[:, :, 2:2 + w, :]],
        axis=-1).astype(jnp.bfloat16)                               # (tt+2, h+2, w, 3*cin)

    acc = jnp.zeros((rows, cout), jnp.float32)
    for kt in range(3):
        for kh in range(3):
            patch = awbuf[kt:kt + tt, kh:kh + h].reshape(rows, 3 * cin)
            acc = acc + jnp.dot(patch, w_ref[kt * 3 + kh],
                                preferred_element_type=jnp.float32)
    y = acc + b_ref[...]                                            # (rows, cout) f32

    # --- fused norm2 statistics of the conv output (saves an HBM pass over h) ---------
    if emit_stats:
        s = jnp.sum(y, axis=0, keepdims=True)                       # (1, cout)
        q = jnp.sum(y * y, axis=0, keepdims=True)

        @pl.when(t_idx == 0)
        def _init_stats():
            sum_ref[0] = s
            ssq_ref[0] = q

        @pl.when(t_idx > 0)
        def _acc_stats():
            sum_ref[0] = sum_ref[0] + s
            ssq_ref[0] = ssq_ref[0] + q

    # --- fused residual shortcut (1x1 conv or identity) + 1/output_scale_factor -------
    if fuse_residual:
        r = r_ref[0].reshape(rows, -1)
        if has_projection:
            short = jnp.dot(r.astype(jnp.bfloat16), scw_ref[...],
                            preferred_element_type=jnp.float32) + scb_ref[...]
        else:
            short = r.astype(jnp.float32)
        y = (y + short) * inv_out_scale

    o_ref[0] = y.reshape(tt, h, w, cout).astype(o_ref.dtype)


def fused_norm_silu_causal_conv3d(x, scale, shift, w_fold, bias, *, t_tile,
                                  emit_stats=False, residual=None,
                                  shortcut_w=None, shortcut_b=None,
                                  output_scale_factor=1.0):
    # x: (B, T, H, W, Cin); scale/shift: (B, 1, Cin) f32
    # w_fold: (9, 3*Cin, Cout) bf16 [(kt*3+kh) major, (kw, cin) contraction]; bias: (1, Cout)
    B, T, H, W, Cin = x.shape
    Cout = w_fold.shape[-1]
    assert T % t_tile == 0
    n_t = T // t_tile
    if n_t > 1:
        assert t_tile % 2 == 0, "temporal tile must be even when tiling T (halo alignment)"
    half = max(t_tile // 2, 1)
    halo_t = min(2, T)

    fuse_residual = residual is not None
    has_projection = shortcut_w is not None
    inv_out_scale = 1.0 / float(output_scale_factor)

    in_specs = [
        pl.BlockSpec((1, t_tile, H, W, Cin), lambda b, t: (b, t, 0, 0, 0)),
        # Temporal halo: the 2 frames preceding this tile.  Block index is clamped at the
        # sequence start; the kernel uses zeros there instead (the clamped DMA is unused).
        pl.BlockSpec((1, halo_t, H, W, Cin),
                     lambda b, t: (b, jnp.maximum(t * half - 1, 0), 0, 0, 0)),
        pl.BlockSpec((1, 1, Cin), lambda b, t: (b, 0, 0)),
        pl.BlockSpec((1, 1, Cin), lambda b, t: (b, 0, 0)),
        pl.BlockSpec((9, 3 * Cin, Cout), lambda b, t: (0, 0, 0)),
        pl.BlockSpec((1, Cout), lambda b, t: (0, 0)),
    ]
    args = [x, x, scale, shift, w_fold, bias]
    if fuse_residual:
        Cr = residual.shape[-1]
        in_specs.append(pl.BlockSpec((1, t_tile, H, W, Cr), lambda b, t: (b, t, 0, 0, 0)))
        args.append(residual)
        if has_projection:
            in_specs.append(pl.BlockSpec((Cr, Cout), lambda b, t: (0, 0)))
            in_specs.append(pl.BlockSpec((1, Cout), lambda b, t: (0, 0)))
            args.extend([shortcut_w, shortcut_b])

    out_shape = [jax.ShapeDtypeStruct((B, T, H, W, Cout), x.dtype)]
    out_specs = [pl.BlockSpec((1, t_tile, H, W, Cout), lambda b, t: (b, t, 0, 0, 0))]
    if emit_stats:
        out_shape += [jax.ShapeDtypeStruct((B, 1, Cout), jnp.float32)] * 2
        out_specs += [pl.BlockSpec((1, 1, Cout), lambda b, t: (b, 0, 0)),
                      pl.BlockSpec((1, 1, Cout), lambda b, t: (b, 0, 0))]

    kernel = functools.partial(
        _fused_norm_silu_conv3d_kernel,
        emit_stats=emit_stats, fuse_residual=fuse_residual,
        has_projection=has_projection, inv_out_scale=inv_out_scale)

    # Stats accumulation revisits its output block across t -> t must be "arbitrary" then.
    dims = ("parallel", "arbitrary") if emit_stats else ("parallel", "parallel")

    return pl.pallas_call(
        kernel,
        out_shape=tuple(out_shape) if emit_stats else out_shape[0],
        grid=(B, n_t),
        in_specs=in_specs,
        out_specs=tuple(out_specs) if emit_stats else out_specs[0],
        scratch_shapes=[pltpu.VMEM((t_tile + 2, H + 2, W + 2, Cin), jnp.float32)],
        compiler_params=pltpu.CompilerParams(
            dimension_semantics=dims,
            vmem_limit_bytes=_vmem_limit_bytes()),
    )(*args)


# ---------------------------------------------------------------------------
# One-time parameter preparation (weight fold + bf16 cast, hoisted out of forward)
# ---------------------------------------------------------------------------
def prepare_params(params):
    Cout, Cin = params["conv1_w"].shape[:2]

    def fold(wt, ci, co):
        # (Cout, Cin, kt, kh, kw) -> (kt, kh, kw, Cin, Cout) -> (9, 3*Cin, Cout), bf16
        return jnp.transpose(wt, (2, 3, 4, 1, 0)).reshape(9, 3 * ci, co).astype(jnp.bfloat16)

    prep = {
        "gamma1": params["gamma1"].astype(jnp.float32),
        "beta1": params["beta1"].astype(jnp.float32),
        "gamma2": params["gamma2"].astype(jnp.float32),
        "beta2": params["beta2"].astype(jnp.float32),
        "w1": fold(params["conv1_w"], Cin, Cout),
        "b1": params["conv1_b"].reshape(1, Cout).astype(jnp.float32),
        "w2": fold(params["conv2_w"], Cout, Cout),
        "b2": params["conv2_b"].reshape(1, Cout).astype(jnp.float32),
    }
    if "sc_w" in params:
        prep["sc_w"] = jnp.transpose(params["sc_w"].reshape(Cout, Cin)).astype(jnp.bfloat16)
        prep["sc_b"] = params["sc_b"].reshape(1, Cout).astype(jnp.float32)
    return prep


# ---------------------------------------------------------------------------
# Full ResidualBlock3D forward (NCDHW in / NCDHW out, like the torch module)
# ---------------------------------------------------------------------------
def residual_block_3d_forward(x, prep, *, num_groups, eps, output_scale_factor,
                              t_tile=None):
    B, Cin, T, H, W = x.shape
    Cout = prep["b1"].shape[-1]
    G = num_groups

    xl = jnp.transpose(x, (0, 2, 3, 4, 1))          # NCDHW -> (B, T, H, W, C)
    if t_tile is None:
        t_tile = _pick_t_tile(T, H, W, Cin, Cout)

    # norm1 moments -> fused (norm1 + SiLU + conv1), which also emits norm2 moments
    s1, q1 = channel_moments(xl, t_tile)
    scale1, shift1 = _gn_scale_shift_from_moments(
        s1, q1, prep["gamma1"], prep["beta1"], G, float(eps), float(T * H * W * (Cin // G)))

    h, s2, q2 = fused_norm_silu_causal_conv3d(
        xl, scale1, shift1, prep["w1"], prep["b1"], t_tile=t_tile, emit_stats=True)

    scale2, shift2 = _gn_scale_shift_from_moments(
        s2, q2, prep["gamma2"], prep["beta2"], G, float(eps), float(T * H * W * (Cout // G)))

    # fused (norm2 + SiLU + dropout(p=0)=identity + conv2 + shortcut, /output_scale_factor)
    out = fused_norm_silu_causal_conv3d(
        h, scale2, shift2, prep["w2"], prep["b2"], t_tile=t_tile,
        residual=xl, shortcut_w=prep.get("sc_w"), shortcut_b=prep.get("sc_b"),
        output_scale_factor=output_scale_factor)

    return jnp.transpose(out, (0, 4, 1, 2, 3))      # back to NCDHW


# ---------------------------------------------------------------------------
# Pure-JAX reference (mirrors PyTorch semantics) for the correctness check
# ---------------------------------------------------------------------------
def _ref_group_norm(x, gamma, beta, G, eps):
    B, C = x.shape[:2]
    xg = x.reshape(B, G, -1)
    mean = xg.mean(axis=2, keepdims=True)
    var = xg.var(axis=2, keepdims=True)
    xn = ((xg - mean) / jnp.sqrt(var + eps)).reshape(x.shape)
    shp = (1, C, 1, 1, 1)
    return xn * gamma.reshape(shp) + beta.reshape(shp)


def _ref_causal_conv3d(x, w, b):
    xp = jnp.pad(x, ((0, 0), (0, 0), (2, 0), (1, 1), (1, 1)))
    y = lax.conv_general_dilated(xp, w, window_strides=(1, 1, 1), padding="VALID",
                                 dimension_numbers=("NCDHW", "OIDHW", "NCDHW"),
                                 precision=lax.Precision.HIGHEST)
    return y + b.reshape(1, -1, 1, 1, 1)


def _ref_forward(x, params, *, num_groups, eps, output_scale_factor):
    Cin = x.shape[1]
    Cout = params["conv1_w"].shape[0]
    if Cin != Cout:
        sc = lax.conv_general_dilated(x, params["sc_w"], (1, 1, 1), "VALID",
                                      dimension_numbers=("NCDHW", "OIDHW", "NCDHW"),
                                      precision=lax.Precision.HIGHEST)
        sc = sc + params["sc_b"].reshape(1, -1, 1, 1, 1)
    else:
        sc = x
    h = jax.nn.silu(_ref_group_norm(x, params["gamma1"], params["beta1"], num_groups, eps))
    h = _ref_causal_conv3d(h, params["conv1_w"], params["conv1_b"])
    h = jax.nn.silu(_ref_group_norm(h, params["gamma2"], params["beta2"], num_groups, eps))
    h = _ref_causal_conv3d(h, params["conv2_w"], params["conv2_b"])
    return (h + sc) / output_scale_factor


if __name__ == "__main__":
    def _run_case(key, B, Cin, Cout, T, H, W, G, eps, scale_factor, t_tile=None):
        ks = jax.random.split(key, 11)
        x = jax.random.normal(ks[0], (B, Cin, T, H, W), jnp.float32)
        params = {
            "gamma1": 1.0 + 0.1 * jax.random.normal(ks[1], (Cin,), jnp.float32),
            "beta1": 0.1 * jax.random.normal(ks[2], (Cin,), jnp.float32),
            "conv1_w": 0.1 * jax.random.normal(ks[3], (Cout, Cin, 3, 3, 3), jnp.float32),
            "conv1_b": 0.05 * jax.random.normal(ks[4], (Cout,), jnp.float32),
            "gamma2": 1.0 + 0.1 * jax.random.normal(ks[5], (Cout,), jnp.float32),
            "beta2": 0.1 * jax.random.normal(ks[6], (Cout,), jnp.float32),
            "conv2_w": 0.1 * jax.random.normal(ks[7], (Cout, Cout, 3, 3, 3), jnp.float32),
            "conv2_b": 0.05 * jax.random.normal(ks[8], (Cout,), jnp.float32),
        }
        if Cin != Cout:
            params["sc_w"] = 0.2 * jax.random.normal(ks[9], (Cout, Cin, 1, 1, 1), jnp.float32)
            params["sc_b"] = 0.05 * jax.random.normal(ks[10], (Cout,), jnp.float32)

        prep = prepare_params(params)
        out = residual_block_3d_forward(x, prep, num_groups=G, eps=eps,
                                        output_scale_factor=scale_factor, t_tile=t_tile)
        out = jax.block_until_ready(out)
        assert out.shape == (B, Cout, T, H, W)

        ref = _ref_forward(x, params, num_groups=G, eps=eps,
                           output_scale_factor=scale_factor)
        err = jnp.abs(out - ref)
        max_err = float(jnp.max(err))
        mean_err = float(jnp.mean(err))
        # bf16 matmul inputs (two chained 3x3x3 convs) -> expect ~1e-2 max abs error.
        if max_err > 1.2e-1 or mean_err > 2.5e-2:
            raise AssertionError(
                f"Pallas result mismatch vs reference: max {max_err}, mean {mean_err}")

    key = jax.random.PRNGKey(0)
    k1, k2 = jax.random.split(key)
    # projection-shortcut path; force t_tile=4 so the temporal halo + stats accumulation
    # across tiles are exercised (auto pick would use a single tile at this small shape).
    _run_case(k1, B=2, Cin=16, Cout=32, T=8, H=8, W=8, G=4, eps=1e-6, scale_factor=1.0,
              t_tile=4)
    # identity-shortcut path, odd T (single temporal tile, causal zero-pad only), scale != 1
    _run_case(k2, B=2, Cin=16, Cout=16, T=5, H=8, W=8, G=4, eps=1e-6, scale_factor=2.0)

    print("KERNEL_OK")
</pallas_src>

<mosaic_0001>
module attributes {stable_mosaic.version = 11 : i64} {
  func.func @_channel_moments_kernel(%arg0: i32, %arg1: i32, %arg2: memref<1x4x8x8x16xf32, #tpu.memory_space<vmem>>, %arg3: memref<1x1x16xf32, #tpu.memory_space<vmem>>, %arg4: memref<1x1x16xf32, #tpu.memory_space<vmem>>) attributes {dimension_semantics = [#tpu.dimension_semantics<parallel>, #tpu.dimension_semantics<arbitrary>], iteration_bounds = array<i64: 2, 2>, scalar_prefetch = 0 : i64, scratch_operands = 0 : i64, tpu.core_type = #tpu.core_type<tc>, window_params = [{transform_indices = @transform_0, window_bounds = array<i64: 1, 4, 8, 8, 16>}, {transform_indices = @transform_1, window_bounds = array<i64: 1, 1, 16>}, {transform_indices = @transform_2, window_bounds = array<i64: 1, 1, 16>}]} {
    %c0 = arith.constant 0 : index
    %c0_0 = arith.constant 0 : index
    %c0_1 = arith.constant 0 : index
    %c0_2 = arith.constant 0 : index
    %c0_3 = arith.constant 0 : index
    %0 = vector.load %arg2[%c0, %c0_0, %c0_1, %c0_2, %c0_3] : memref<1x4x8x8x16xf32, #tpu.memory_space<vmem>>, vector<1x4x8x8x16xf32>
    %1 = vector.shape_cast %0 : vector<1x4x8x8x16xf32> to vector<4x8x8x16xf32>
    %2 = vector.shape_cast %1 : vector<4x8x8x16xf32> to vector<256x16xf32>
    %cst = arith.constant dense<0.000000e+00> : vector<16xf32>
    %3 = vector.multi_reduction <add>, %2, %cst [0] : vector<256x16xf32> to vector<16xf32>
    %4 = vector.shape_cast %3 : vector<16xf32> to vector<1x16xf32>
    %5 = arith.mulf %2, %2 : vector<256x16xf32>
    %cst_4 = arith.constant dense<0.000000e+00> : vector<16xf32>
    %6 = vector.multi_reduction <add>, %5, %cst_4 [0] : vector<256x16xf32> to vector<16xf32>
    %7 = vector.shape_cast %6 : vector<16xf32> to vector<1x16xf32>
    %c0_i32 = arith.constant 0 : i32
    %8 = arith.cmpi eq, %arg1, %c0_i32 : i32
    %9 = arith.extui %8 : i1 to i32
    %c0_i32_5 = arith.constant 0 : i32
    %10 = arith.cmpi ne, %9, %c0_i32_5 : i32
    scf.if %10 {
      %c0_8 = arith.constant 0 : index
      %c0_9 = arith.constant 0 : index
      %c0_10 = arith.constant 0 : index
      %14 = vector.load %arg3[%c0_8, %c0_9, %c0_10] : memref<1x1x16xf32, #tpu.memory_space<vmem>>, vector<1x1x16xf32>
      %15 = vector.shape_cast %14 : vector<1x1x16xf32> to vector<1x16xf32>
      %16 = vector.shape_cast %4 : vector<1x16xf32> to vector<1x1x16xf32>
      tpu.vector_store %arg3[%c0_8, %c0_9, %c0_10], %16 {strides = array<i32>} : memref<1x1x16xf32, #tpu.memory_space<vmem>>, vector<1x1x16xf32>,
      %c0_11 = arith.constant 0 : index
      %c0_12 = arith.constant 0 : index
      %c0_13 = arith.constant 0 : index
      %17 = vector.load %arg4[%c0_11, %c0_12, %c0_13] : memref<1x1x16xf32, #tpu.memory_space<vmem>>, vector<1x1x16xf32>
      %18 = vector.shape_cast %17 : vector<1x1x16xf32> to vector<1x16xf32>
      %19 = vector.shape_cast %7 : vector<1x16xf32> to vector<1x1x16xf32>
      tpu.vector_store %arg4[%c0_11, %c0_12, %c0_13], %19 {strides = array<i32>} : memref<1x1x16xf32, #tpu.memory_space<vmem>>, vector<1x1x16xf32>,
    } else {
    }
    %c0_i32_6 = arith.constant 0 : i32
    %11 = arith.cmpi sgt, %arg1, %c0_i32_6 : i32
    %12 = arith.extui %11 : i1 to i32
    %c0_i32_7 = arith.constant 0 : i32
    %13 = arith.cmpi ne, %12, %c0_i32_7 : i32
    scf.if %13 {
      %c0_8 = arith.constant 0 : index
      %c0_9 = arith.constant 0 : index
      %c0_10 = arith.constant 0 : index
      %14 = vector.load %arg3[%c0_8, %c0_9, %c0_10] : memref<1x1x16xf32, #tpu.memory_space<vmem>>, vector<1x1x16xf32>
      %15 = vector.shape_cast %14 : vector<1x1x16xf32> to vector<1x16xf32>
      %16 = arith.addf %15, %4 : vector<1x16xf32>
      %c0_11 = arith.constant 0 : index
      %c0_12 = arith.constant 0 : index
      %c0_13 = arith.constant 0 : index
      %17 = vector.load %arg3[%c0_11, %c0_12, %c0_13] : memref<1x1x16xf32, #tpu.memory_space<vmem>>, vector<1x1x16xf32>
      %18 = vector.shape_cast %17 : vector<1x1x16xf32> to vector<1x16xf32>
      %19 = vector.shape_cast %16 : vector<1x16xf32> to vector<1x1x16xf32>
      tpu.vector_store %arg3[%c0_11, %c0_12, %c0_13], %19 {strides = array<i32>} : memref<1x1x16xf32, #tpu.memory_space<vmem>>, vector<1x1x16xf32>,
      %c0_14 = arith.constant 0 : index
      %c0_15 = arith.constant 0 : index
      %c0_16 = arith.constant 0 : index
      %20 = vector.load %arg4[%c0_14, %c0_15, %c0_16] : memref<1x1x16xf32, #tpu.memory_space<vmem>>, vector<1x1x16xf32>
      %21 = vector.shape_cast %20 : vector<1x1x16xf32> to vector<1x16xf32>
      %22 = arith.addf %21, %7 : vector<1x16xf32>
      %c0_17 = arith.constant 0 : index
      %c0_18 = arith.constant 0 : index
      %c0_19 = arith.constant 0 : index
      %23 = vector.load %arg4[%c0_17, %c0_18, %c0_19] : memref<1x1x16xf32, #tpu.memory_space<vmem>>, vector<1x1x16xf32>
      %24 = vector.shape_cast %23 : vector<1x1x16xf32> to vector<1x16xf32>
      %25 = vector.shape_cast %22 : vector<1x16xf32> to vector<1x1x16xf32>
      tpu.vector_store %arg4[%c0_17, %c0_18, %c0_19], %25 {strides = array<i32>} : memref<1x1x16xf32, #tpu.memory_space<vmem>>, vector<1x1x16xf32>,
    } else {
    }
    return
  }
  func.func @transform_0(%arg0: i32, %arg1: i32) -> (i32, i32, i32, i32, i32) {
    %c0_i32 = arith.constant 0 : i32
    %c0_i32_0 = arith.constant 0 : i32
    %c0_i32_1 = arith.constant 0 : i32
    %c0_i32_2 = arith.constant 0 : i32
    return %arg0, %arg1, %c0_i32, %c0_i32_0, %c0_i32_1 : i32, i32, i32, i32, i32
  }
  func.func @transform_1(%arg0: i32, %arg1: i32) -> (i32, i32, i32) {
    %c0_i32 = arith.constant 0 : i32
    %c0_i32_0 = arith.constant 0 : i32
    %c0_i32_1 = arith.constant 0 : i32
    return %arg0, %c0_i32, %c0_i32_0 : i32, i32, i32
  }
  func.func @transform_2(%arg0: i32, %arg1: i32) -> (i32, i32, i32) {
    %c0_i32 = arith.constant 0 : i32
    %c0_i32_0 = arith.constant 0 : i32
    %c0_i32_1 = arith.constant 0 : i32
    return %arg0, %c0_i32, %c0_i32_0 : i32, i32, i32
  }
}

</mosaic_0001>

<llo_original>
// kernel: tpu_custom_call.1
$region0: #{tpu_custom_call.1}
  #allocation0 [shape = 'u32[]', space=smem, size = 0x4, offset = 0x4, fixed_abs, tag = 'smem constant byte address 0x4 - core index']
  #allocation1 [shape = 'u32[144,128]{1,0:T(1,128)}', space=vmem, size = 0x12000, scoped, tag = 'internal scratch']
  %s0 = inlined_call_operand.hbm [shape: f32[2,8,8,8,16], index: 0, kind: input, shape index: {}]
  %s1 = inlined_call_operand.hbm [shape: f32[2,1,16], index: 1, kind: output, shape index: {0}]
  %s2 = inlined_call_operand.hbm [shape: f32[2,1,16], index: 2, kind: output, shape index: {1}]
  %3 = xla_tuple %s1, %s2
  %s4 = sld [smem:[#allocation0]]
  $region57: #{tpu_custom_call.1} parent=0
    _
  %s6 = ssub.s32 1, %s4
  %s7 = scalar_select 0, %s6, %s4
  $region1: #{tpu_custom_call.1} parent=0
    #allocation2 [shape = 'u8[262144]{0}', space=vmem, size = 0x40000, scoped, tag = 'input window, operand 0']
    #allocation3 [shape = 's32[2]{0}', space=sflag, size = 0x8, scoped, tag = 'scoped memory for tpu_custom_call.1']
    #allocation4 [shape = 's32[2]{0}', space=sflag, size = 0x8, scoped, tag = 'scoped memory for tpu_custom_call.1']
    #allocation5 [shape = 'u8[1024]{0}', space=vmem, size = 0x400, scoped, tag = 'output window, operand 0']
    #allocation6 [shape = 'u8[1024]{0}', space=vmem, size = 0x400, scoped, tag = 'output window, operand 1']
    #allocation7 [shape = 's32[2]{0}', space=sflag, size = 0x8, scoped, tag = 'scoped memory for tpu_custom_call.1']
    %8 = vsyncpa [#allocation3], 0
    %s9 = scalar_lea.sflag [#allocation3], 1
    %10 = vsyncpa %s9, 0
    %11 = vsyncpa [#allocation4], 0
    %s12 = scalar_lea.sflag [#allocation4], 1
    %13 = vsyncpa %s12, 0
    %14 = vsyncpa [#allocation7], 0
    %s15 = scalar_lea.sflag [#allocation7], 1
    %16 = vsyncpa %s15, 0
    loop: start=0, step=1, limit=6
    $region2: #{tpu_custom_call.1} parent=1 // loop_pre_header
      _
    $region3: #{tpu_custom_call.1} parent=1 // loop_header
      %s18 = sphi 0, %s22
      %p19 = scmp.ge.s32.totalorder %s18, 6
      %s25 = sphi 0, %s37
      %s26 = sphi 0, %s33
      %s27 = sphi 0, %s25
      %s28 = sphi 0, %s26
      %s29 = sphi 0, %s27
      %s30 = sphi 0, %s28
      %s42 = sphi 0, %s44
      %s45 = sphi 0, %s42
      %s46 = sphi 0, %s45
      %s62 = sphi 0, %s46
      %s68 = sphi 0, %s70
      %s71 = sphi 0, %s68
      %s72 = sphi 0, %s71
      %s88 = sphi 0, %s72
      %s94 = sphi 0, %s96
      %s97 = sphi 0, %s94
      %s98 = sphi 0, %s97
      %s114 = sphi 0, %s98
    $region4: #{tpu_custom_call.1} parent=1 // loop_header_branch
      %21 = sbr.rel (%p19) target = $region8
    $region5: #{tpu_custom_call.1} parent=1 // loop_body
      %s23 = ssub.s32 %s18, 1
      %s24 = ssub.s32 %s18, 2
      %s31 = sadd.s32 1, %s26
      %p32 = scmp.ge.s32.totalorder %s31, 2
      %s33 = scalar_select %p32, 0, %s31
      %s34 = sadd.s32 1, %s25
      %s35 = scalar_select %p32, %s34, %s25
      %p36 = scmp.ge.s32.totalorder %s35, 2
      %s37 = scalar_select %p36, 0, %s35
      %s38 = ssub.s32 %s25, %s37
      %s39 = ssub.s32 %s26, %s33
      %s40 = sor.u32 %s38, %s39
      %p41 = scmp.eq.s32.totalorder %s40, 0
      %s43 = sadd.s32 %s42, 1
      %s44 = scalar_select %p41, %s42, %s43
      %p47 = pneg %p41
      %p48 = scmp.eq.s32.totalorder %s18, 3
      %p49 = por %p47, %p48
      %p50 = scmp.ne.s32.totalorder %s42, %s45
      %p51 = scmp.eq.s32.totalorder %s18, 0
      %p52 = por %p50, %p51
      %p53 = scmp.ne.s32.totalorder %s42, %s45
      %p54 = scmp.eq.s32.totalorder %s23, 3
      %p55 = por %p53, %p54
      %p56 = scmp.ne.s32.totalorder %s45, %s46
      %p57 = scmp.eq.s32.totalorder %s23, 0
      %p58 = por %p56, %p57
      %p59 = scmp.ne.s32.totalorder %s45, %s46
      %p60 = scmp.eq.s32.totalorder %s24, 3
      %p61 = por %p59, %p60
      %p63 = scmp.ne.s32.totalorder %s46, %s62
      %p64 = scmp.eq.s32.totalorder %s24, 0
      %p65 = por %p63, %p64
      %s66 = ssub.s32 %s25, %s37
      %p67 = scmp.eq.s32.totalorder %s66, 0
      %s69 = sadd.s32 %s68, 1
      %s70 = scalar_select %p67, %s68, %s69
      %p73 = pneg %p67
      %p74 = scmp.eq.s32.totalorder %s18, 3
      %p75 = por %p73, %p74
      %p76 = scmp.ne.s32.totalorder %s68, %s71
      %p77 = scmp.eq.s32.totalorder %s18, 0
      %p78 = por %p76, %p77
      %p79 = scmp.ne.s32.totalorder %s68, %s71
      %p80 = scmp.eq.s32.totalorder %s23, 3
      %p81 = por %p79, %p80
      %p82 = scmp.ne.s32.totalorder %s71, %s72
      %p83 = scmp.eq.s32.totalorder %s23, 0
      %p84 = por %p82, %p83
      %p85 = scmp.ne.s32.totalorder %s71, %s72
      %p86 = scmp.eq.s32.totalorder %s24, 3
      %p87 = por %p85, %p86
      %p89 = scmp.ne.s32.totalorder %s72, %s88
      %p90 = scmp.eq.s32.totalorder %s24, 0
      %p91 = por %p89, %p90
      %s92 = ssub.s32 %s25, %s37
      %p93 = scmp.eq.s32.totalorder %s92, 0
      %s95 = sadd.s32 %s94, 1
      %s96 = scalar_select %p93, %s94, %s95
      %p99 = pneg %p93
      %p100 = scmp.eq.s32.totalorder %s18, 3
      %p101 = por %p99, %p100
      %p102 = scmp.ne.s32.totalorder %s94, %s97
      %p103 = scmp.eq.s32.totalorder %s18, 0
      %p104 = por %p102, %p103
      %p105 = scmp.ne.s32.totalorder %s94, %s97
      %p106 = scmp.eq.s32.totalorder %s23, 3
      %p107 = por %p105, %p106
      %p108 = scmp.ne.s32.totalorder %s97, %s98
      %p109 = scmp.eq.s32.totalorder %s23, 0
      %p110 = por %p108, %p109
      %p111 = scmp.ne.s32.totalorder %s97, %s98
      %p112 = scmp.eq.s32.totalorder %s24, 3
      %p113 = por %p111, %p112
      %p115 = scmp.ne.s32.totalorder %s98, %s114
      %p116 = scmp.eq.s32.totalorder %s24, 0
      %p117 = por %p115, %p116
      %p118 = scmp.le.s32.totalorder 1, %s18
      %p119 = scmp.lt.s32.totalorder %s18, 5
      %p120 = pnand %p118, %p119
      %p121 = pneg %p120
      // Predicated region
      $region9: #{tpu_custom_call.1} parent=5 // pred_check
        _
      $region10: #{tpu_custom_call.1} parent=5 // pred_check_branch
        %123 = sbr.rel (%p120) target = $region12
      $region11: #{tpu_custom_call.1} parent=5 // pred_region
        %s124 = ssub.s32 %s18, 1
      $region12: #{tpu_custom_call.1} parent=5 // pred_fallthru
        _
      %p125 = scmp.lt.s32.totalorder %s18, 4
      // Predicated region
      $region13: #{tpu_custom_call.1} parent=5 // pred_check
        %p126 = pneg %p125
      $region14: #{tpu_custom_call.1} parent=5 // pred_check_branch
        %128 = sbr.rel (%p126) target = $region16
      $region15: #{tpu_custom_call.1} parent=5 // pred_region
        // Predicated region
        $region17: #{tpu_custom_call.1} parent=15 // pred_check
          %p129 = pneg %p52
        $region18: #{tpu_custom_call.1} parent=15 // pred_check_branch
          %131 = sbr.rel (%p129) target = $region20
        $region19: #{tpu_custom_call.1} parent=15 // pred_region
          %s132 = sand.u32 %s42, 1
          %s133 = scalar_lea.sflag [#allocation3], %s132
          %s134 = sand.u32 %s42, 1
          %s135 = smul.addr %s134, 256
          %s136 = scalar_lea.vmem [#allocation2], %s135
          %s137 = smul.u32 4, %s26
          %s139 = ssub.s32 4096, 4096
          %140 = vsyncadd %s133, %s139
          %s141 = smul.addr %s137, 8
          %s142 = smul.addr %s25, 64
          %s143 = sadd.s32 %s141, %s142
          %s144 = smul.addr %s143, 128
          %s145 = scalar_lea.hbm %s0, %s144
          %s146 = sshll.u32 %s136, 4
          %s147 = int_to_ptr.vmem [resolvable:$true] %s146
          %152 = dma.hbm_to_vmem [thread:$0]  %s145, 4096, %s147, %s133, 128, 128, 8
        $region20: #{tpu_custom_call.1} parent=15 // pred_fallthru
          _
      $region16: #{tpu_custom_call.1} parent=5 // pred_fallthru
        _
      %p153 = scmp.le.s32.totalorder 1, %s18
      %p154 = scmp.lt.s32.totalorder %s18, 5
      %p155 = pnand %p153, %p154
      %p156 = pneg %p155
      // Predicated region
      $region21: #{tpu_custom_call.1} parent=5 // pred_check
        _
      $region22: #{tpu_custom_call.1} parent=5 // pred_check_branch
        %158 = sbr.rel (%p155) target = $region24
      $region23: #{tpu_custom_call.1} parent=5 // pred_region
        %s159 = ssub.s32 %s18, 1
        %s160 = sand.u32 %s45, 1
        %s161 = scalar_lea.sflag [#allocation3], %s160
        %s162 = sand.u32 %s45, 1
        %s163 = smul.addr %s162, 256
        %s164 = scalar_lea.vmem [#allocation2], %s163
        // Predicated region
        $region25: #{tpu_custom_call.1} parent=23 // pred_check
          %p165 = pneg %p58
        $region26: #{tpu_custom_call.1} parent=23 // pred_check_branch
          %167 = sbr.rel (%p165) target = $region28
        $region27: #{tpu_custom_call.1} parent=23 // pred_region
          %168 = dma.done %s161, 4096
        $region28: #{tpu_custom_call.1} parent=23 // pred_fallthru
          _
        %s169 = sand.u32 %s45, 1
        %s170 = scalar_lea.sflag [#allocation3], %s169
        %s171 = sand.u32 %s45, 1
        %s172 = smul.addr %s171, 256
        %s173 = scalar_lea.vmem [#allocation2], %s172
        %p174 = pneg %p58
        %p175 = pneg %p55
        %p176 = pneg %p84
        %p177 = pneg %p81
        %s178 = sand.u32 %s71, 1
        %s179 = scalar_lea.sflag [#allocation4], %s178
        %s180 = sand.u32 %s71, 1
        %s181 = scalar_lea.vmem [#allocation5], %s180
        %p182 = pneg %p110
        %p183 = pneg %p107
        %s184 = sand.u32 %s97, 1
        %s185 = scalar_lea.sflag [#allocation7], %s184
        %s186 = sand.u32 %s97, 1
        %s187 = scalar_lea.vmem [#allocation6], %s186
        %s188 = smul.u32 4, %s28
        %v189 = vld [vmem:[%s164] sm:$0xff]
        %v190 = vld [vmem:[%s164 + $0x8] sm:$0xff]
        %v191 = vld [vmem:[%s164 + $0x10] sm:$0xff]
        %v192 = vld [vmem:[%s164 + $0x18] sm:$0xff]
        %v193 = vld [vmem:[%s164 + $0x20] sm:$0xff]
        %v194 = vld [vmem:[%s164 + $0x28] sm:$0xff]
        %v195 = vld [vmem:[%s164 + $0x30] sm:$0xff]
        %v196 = vld [vmem:[%s164 + $0x38] sm:$0xff]
        %v197 = vld [vmem:[%s164 + $0x40] sm:$0xff]
        %v198 = vld [vmem:[%s164 + $0x48] sm:$0xff]
        %v199 = vld [vmem:[%s164 + $0x50] sm:$0xff]
        %v200 = vld [vmem:[%s164 + $0x58] sm:$0xff]
        %v201 = vld [vmem:[%s164 + $0x60] sm:$0xff]
        %v202 = vld [vmem:[%s164 + $0x68] sm:$0xff]
        %v203 = vld [vmem:[%s164 + $0x70] sm:$0xff]
        %v204 = vld [vmem:[%s164 + $0x78] sm:$0xff]
        %v205 = vld [vmem:[%s164 + $0x80] sm:$0xff]
        %v206 = vld [vmem:[%s164 + $0x88] sm:$0xff]
        %v207 = vld [vmem:[%s164 + $0x90] sm:$0xff]
        %v208 = vld [vmem:[%s164 + $0x98] sm:$0xff]
        %v209 = vld [vmem:[%s164 + $0xa0] sm:$0xff]
        %v210 = vld [vmem:[%s164 + $0xa8] sm:$0xff]
        %v211 = vld [vmem:[%s164 + $0xb0] sm:$0xff]
        %v212 = vld [vmem:[%s164 + $0xb8] sm:$0xff]
        %v213 = vld [vmem:[%s164 + $0xc0] sm:$0xff]
        %v214 = vld [vmem:[%s164 + $0xc8] sm:$0xff]
        %v215 = vld [vmem:[%s164 + $0xd0] sm:$0xff]
        %v216 = vld [vmem:[%s164 + $0xd8] sm:$0xff]
        %v217 = vld [vmem:[%s164 + $0xe0] sm:$0xff]
        %v218 = vld [vmem:[%s164 + $0xe8] sm:$0xff]
        %v219 = vld [vmem:[%s164 + $0xf0] sm:$0xff]
        %v220 = vld [vmem:[%s164 + $0xf8] sm:$0xff]
        %vm221 = vcmask 130048
        %v222 = vsel %vm221, %v189, 0.0
        %v223 = vsel %vm221, %v190, 0.0
        %v224 = vadd.f32 %v222, %v223
        %v225 = vsel %vm221, %v191, 0.0
        %v226 = vadd.f32 %v224, %v225
        %v227 = vsel %vm221, %v192, 0.0
        %v228 = vadd.f32 %v226, %v227
        %v229 = vsel %vm221, %v193, 0.0
        %v230 = vadd.f32 %v228, %v229
        %v231 = vsel %vm221, %v194, 0.0
        %v232 = vadd.f32 %v230, %v231
        %v233 = vsel %vm221, %v195, 0.0
        %v234 = vadd.f32 %v232, %v233
        %v235 = vsel %vm221, %v196, 0.0
        %v236 = vadd.f32 %v234, %v235
        %v237 = vsel %vm221, %v197, 0.0
        %v238 = vadd.f32 %v236, %v237
        %v239 = vsel %vm221, %v198, 0.0
        %v240 = vadd.f32 %v238, %v239
        %v241 = vsel %vm221, %v199, 0.0
        %v242 = vadd.f32 %v240, %v241
        %v243 = vsel %vm221, %v200, 0.0
        %v244 = vadd.f32 %v242, %v243
        %v245 = vsel %vm221, %v201, 0.0
        %v246 = vadd.f32 %v244, %v245
        %v247 = vsel %vm221, %v202, 0.0
        %v248 = vadd.f32 %v246, %v247
        %v249 = vsel %vm221, %v203, 0.0
        %v250 = vadd.f32 %v248, %v249
        %v251 = vsel %vm221, %v204, 0.0
        %v252 = vadd.f32 %v250, %v251
        %v253 = vsel %vm221, %v205, 0.0
        %v254 = vadd.f32 %v252, %v253
        %v255 = vsel %vm221, %v206, 0.0
        %v256 = vadd.f32 %v254, %v255
        %v257 = vsel %vm221, %v207, 0.0
        %v258 = vadd.f32 %v256, %v257
        %v259 = vsel %vm221, %v208, 0.0
        %v260 = vadd.f32 %v258, %v259
        %v261 = vsel %vm221, %v209, 0.0
        %v262 = vadd.f32 %v260, %v261
        %v263 = vsel %vm221, %v210, 0.0
        %v264 = vadd.f32 %v262, %v263
        %v265 = vsel %vm221, %v211, 0.0
        %v266 = vadd.f32 %v264, %v265
        %v267 = vsel %vm221, %v212, 0.0
        %v268 = vadd.f32 %v266, %v267
        %v269 = vsel %vm221, %v213, 0.0
        %v270 = vadd.f32 %v268, %v269
        %v271 = vsel %vm221, %v214, 0.0
        %v272 = vadd.f32 %v270, %v271
        %v273 = vsel %vm221, %v215, 0.0
        %v274 = vadd.f32 %v272, %v273
        %v275 = vsel %vm221, %v216, 0.0
        %v276 = vadd.f32 %v274, %v275
        %v277 = vsel %vm221, %v217, 0.0
        %v278 = vadd.f32 %v276, %v277
        %v279 = vsel %vm221, %v218, 0.0
        %v280 = vadd.f32 %v278, %v279
        %v281 = vsel %vm221, %v219, 0.0
        %v282 = vadd.f32 %v280, %v281
        %v283 = vsel %vm221, %v220, 0.0
        %v284 = vadd.f32 %v282, %v283
        %v285 = vrot.slane %v284, 4
        %v286 = vadd.f32 %v284, %v285
        %v287 = vrot.slane %v286, 2
        %v288 = vadd.f32 %v286, %v287
        %v289 = vrot.slane %v288, 1
        %v290 = vadd.f32 %v288, %v289
        %v291 = vmul.f32 %v189, %v189
        %v292 = vmul.f32 %v190, %v190
        %v293 = vmul.f32 %v191, %v191
        %v294 = vmul.f32 %v192, %v192
        %v295 = vmul.f32 %v193, %v193
        %v296 = vmul.f32 %v194, %v194
        %v297 = vmul.f32 %v195, %v195
        %v298 = vmul.f32 %v196, %v196
        %v299 = vmul.f32 %v197, %v197
        %v300 = vmul.f32 %v198, %v198
        %v301 = vmul.f32 %v199, %v199
        %v302 = vmul.f32 %v200, %v200
        %v303 = vmul.f32 %v201, %v201
        %v304 = vmul.f32 %v202, %v202
        %v305 = vmul.f32 %v203, %v203
        %v306 = vmul.f32 %v204, %v204
        %v307 = vmul.f32 %v205, %v205
        %v308 = vmul.f32 %v206, %v206
        %v309 = vmul.f32 %v207, %v207
        %v310 = vmul.f32 %v208, %v208
        %v311 = vmul.f32 %v209, %v209
        %v312 = vmul.f32 %v210, %v210
        %v313 = vmul.f32 %v211, %v211
        %v314 = vmul.f32 %v212, %v212
        %v315 = vmul.f32 %v213, %v213
        %v316 = vmul.f32 %v214, %v214
        %v317 = vmul.f32 %v215, %v215
        %v318 = vmul.f32 %v216, %v216
        %v319 = vmul.f32 %v217, %v217
        %v320 = vmul.f32 %v218, %v218
        %v321 = vmul.f32 %v219, %v219
        %v322 = vmul.f32 %v220, %v220
        %v323 = vsel %vm221, %v291, 0.0
        %v324 = vsel %vm221, %v292, 0.0
        %v325 = vadd.f32 %v323, %v324
        %v326 = vsel %vm221, %v293, 0.0
        %v327 = vadd.f32 %v325, %v326
        %v328 = vsel %vm221, %v294, 0.0
        %v329 = vadd.f32 %v327, %v328
        %v330 = vsel %vm221, %v295, 0.0
        %v331 = vadd.f32 %v329, %v330
        %v332 = vsel %vm221, %v296, 0.0
        %v333 = vadd.f32 %v331, %v332
        %v334 = vsel %vm221, %v297, 0.0
        %v335 = vadd.f32 %v333, %v334
        %v336 = vsel %vm221, %v298, 0.0
        %v337 = vadd.f32 %v335, %v336
        %v338 = vsel %vm221, %v299, 0.0
        %v339 = vadd.f32 %v337, %v338
        %v340 = vsel %vm221, %v300, 0.0
        %v341 = vadd.f32 %v339, %v340
        %v342 = vsel %vm221, %v301, 0.0
        %v343 = vadd.f32 %v341, %v342
        %v344 = vsel %vm221, %v302, 0.0
        %v345 = vadd.f32 %v343, %v344
        %v346 = vsel %vm221, %v303, 0.0
        %v347 = vadd.f32 %v345, %v346
        %v348 = vsel %vm221, %v304, 0.0
        %v349 = vadd.f32 %v347, %v348
        %v350 = vsel %vm221, %v305, 0.0
        %v351 = vadd.f32 %v349, %v350
        %v352 = vsel %vm221, %v306, 0.0
        %v353 = vadd.f32 %v351, %v352
        %v354 = vsel %vm221, %v307, 0.0
        %v355 = vadd.f32 %v353, %v354
        %v356 = vsel %vm221, %v308, 0.0
        %v357 = vadd.f32 %v355, %v356
        %v358 = vsel %vm221, %v309, 0.0
        %v359 = vadd.f32 %v357, %v358
        %v360 = vsel %vm221, %v310, 0.0
        %v361 = vadd.f32 %v359, %v360
        %v362 = vsel %vm221, %v311, 0.0
        %v363 = vadd.f32 %v361, %v362
        %v364 = vsel %vm221, %v312, 0.0
        %v365 = vadd.f32 %v363, %v364
        %v366 = vsel %vm221, %v313, 0.0
        %v367 = vadd.f32 %v365, %v366
        %v368 = vsel %vm221, %v314, 0.0
        %v369 = vadd.f32 %v367, %v368
        %v370 = vsel %vm221, %v315, 0.0
        %v371 = vadd.f32 %v369, %v370
        %v372 = vsel %vm221, %v316, 0.0
        %v373 = vadd.f32 %v371, %v372
        %v374 = vsel %vm221, %v317, 0.0
        %v375 = vadd.f32 %v373, %v374
        %v376 = vsel %vm221, %v318, 0.0
        %v377 = vadd.f32 %v375, %v376
        %v378 = vsel %vm221, %v319, 0.0
        %v379 = vadd.f32 %v377, %v378
        %v380 = vsel %vm221, %v320, 0.0
        %v381 = vadd.f32 %v379, %v380
        %v382 = vsel %vm221, %v321, 0.0
        %v383 = vadd.f32 %v381, %v382
        %v384 = vsel %vm221, %v322, 0.0
        %v385 = vadd.f32 %v383, %v384
        %v386 = vrot.slane %v385, 4
        %v387 = vadd.f32 %v385, %v386
        %v388 = vrot.slane %v387, 2
        %v389 = vadd.f32 %v387, %v388
        %v390 = vrot.slane %v389, 1
        %v391 = vadd.f32 %v389, %v390
        %p392 = scmp.eq.s32.totalorder %s28, 0
        // Predicated region
        $region29: #{tpu_custom_call.1} parent=23 // pred_check
          %p393 = pneg %p392
        $region30: #{tpu_custom_call.1} parent=23 // pred_check_branch
          %395 = sbr.rel (%p393) target = $region32
        $region31: #{tpu_custom_call.1} parent=23 // pred_region
          %vm396 = vcmask 122880
          %397 = vst.msk [vmem:[%s181] sm:$0x1] %vm396, %v290
          %398 = vst.msk [vmem:[%s187] sm:$0x1] %vm396, %v391
        $region32: #{tpu_custom_call.1} parent=23 // pred_fallthru
          _
        %p399 = scmp.gt.s32.totalorder %s28, 0
        // Predicated region
        $region33: #{tpu_custom_call.1} parent=23 // pred_check
          %p400 = pneg %p399
        $region34: #{tpu_custom_call.1} parent=23 // pred_check_branch
          %402 = sbr.rel (%p400) target = $region36
        $region35: #{tpu_custom_call.1} parent=23 // pred_region
          %v403 = vld [vmem:[%s181] sm:$0x1]
          %v404 = vadd.f32 %v403, %v290
          %vm405 = vcmask 122880
          %406 = vst.msk [vmem:[%s181] sm:$0x1] %vm405, %v404
          %v407 = vld [vmem:[%s187] sm:$0x1]
          %v408 = vadd.f32 %v407, %v391
          %409 = vst.msk [vmem:[%s187] sm:$0x1] %vm405, %v408
        $region36: #{tpu_custom_call.1} parent=23 // pred_fallthru
          _
        %s410 = sand.u32 %s71, 1
        %s411 = scalar_lea.sflag [#allocation4], %s410
        %s412 = sand.u32 %s71, 1
        %s413 = scalar_lea.vmem [#allocation5], %s412
        %s414 = sand.u32 %s97, 1
        %s415 = scalar_lea.sflag [#allocation7], %s414
        %s416 = sand.u32 %s97, 1
        %s417 = scalar_lea.vmem [#allocation6], %s416
        // Predicated region
        $region37: #{tpu_custom_call.1} parent=23 // pred_check
          %p418 = pneg %p81
        $region38: #{tpu_custom_call.1} parent=23 // pred_check_branch
          %420 = sbr.rel (%p418) target = $region40
        $region39: #{tpu_custom_call.1} parent=23 // pred_region
          %s422 = ssub.s32 16, 16
          %423 = vsyncadd %s411, %s422
          %s424 = smul.addr %s27, 16
          %s425 = scalar_lea.hbm %s1, %s424
          %s427 = sshll.u32 %s413, 4
          %s428 = int_to_ptr.vmem [resolvable:$true] %s427
          %430 = dma.vmem_to_hbm [thread:$0]  %s428, 16, %s425, %s411
        $region40: #{tpu_custom_call.1} parent=23 // pred_fallthru
          _
        // Predicated region
        $region41: #{tpu_custom_call.1} parent=23 // pred_check
          %p431 = pneg %p107
        $region42: #{tpu_custom_call.1} parent=23 // pred_check_branch
          %433 = sbr.rel (%p431) target = $region44
        $region43: #{tpu_custom_call.1} parent=23 // pred_region
          %s435 = ssub.s32 16, 16
          %436 = vsyncadd %s415, %s435
          %s437 = smul.addr %s27, 16
          %s438 = scalar_lea.hbm %s2, %s437
          %s440 = sshll.u32 %s417, 4
          %s441 = int_to_ptr.vmem [resolvable:$true] %s440
          %443 = dma.vmem_to_hbm [thread:$0]  %s441, 16, %s438, %s415
        $region44: #{tpu_custom_call.1} parent=23 // pred_fallthru
          _
      $region24: #{tpu_custom_call.1} parent=5 // pred_fallthru
        _
      %p444 = scmp.le.s32.totalorder 2, %s18
      // Predicated region
      $region45: #{tpu_custom_call.1} parent=5 // pred_check
        %p445 = pneg %p444
      $region46: #{tpu_custom_call.1} parent=5 // pred_check_branch
        %447 = sbr.rel (%p445) target = $region48
      $region47: #{tpu_custom_call.1} parent=5 // pred_region
        %s448 = ssub.s32 %s18, 2
        // Predicated region
        $region49: #{tpu_custom_call.1} parent=47 // pred_check
          %p449 = pneg %p87
        $region50: #{tpu_custom_call.1} parent=47 // pred_check_branch
          %451 = sbr.rel (%p449) target = $region52
        $region51: #{tpu_custom_call.1} parent=47 // pred_region
          %s452 = sand.u32 %s72, 1
          %s453 = scalar_lea.sflag [#allocation4], %s452
          %s454 = sand.u32 %s72, 1
          %s455 = scalar_lea.vmem [#allocation5], %s454
          %456 = dma.done %s453, 16
        $region52: #{tpu_custom_call.1} parent=47 // pred_fallthru
          _
        // Predicated region
        $region53: #{tpu_custom_call.1} parent=47 // pred_check
          %p457 = pneg %p113
        $region54: #{tpu_custom_call.1} parent=47 // pred_check_branch
          %459 = sbr.rel (%p457) target = $region56
        $region55: #{tpu_custom_call.1} parent=47 // pred_region
          %s460 = sand.u32 %s98, 1
          %s461 = scalar_lea.sflag [#allocation7], %s460
          %s462 = sand.u32 %s98, 1
          %s463 = scalar_lea.vmem [#allocation6], %s462
          %464 = dma.done %s461, 16
        $region56: #{tpu_custom_call.1} parent=47 // pred_fallthru
          _
      $region48: #{tpu_custom_call.1} parent=5 // pred_fallthru
        _
    $region6: #{tpu_custom_call.1} parent=1 // loop_footer
      %s22 = sadd.s32 1, %s18
    $region7: #{tpu_custom_call.1} parent=1 // loop_footer_branch
      %17 = sbr.rel target = $region3
    $region8: #{tpu_custom_call.1} parent=1 // loop_exit
      _
    %465 = vsyncpa [#allocation3], 1
    %s466 = scalar_lea.sflag [#allocation3], 1
    %467 = vsyncpa %s466, 1
    %468 = vsyncpa [#allocation4], 1
    %s469 = scalar_lea.sflag [#allocation4], 1
    %470 = vsyncpa %s469, 1
    %471 = vsyncpa [#allocation7], 1
    %s472 = scalar_lea.sflag [#allocation7], 1
    %473 = vsyncpa %s472, 1

</llo_original>
